<compile_context>
chip_gen: v6e
topology: v6e:2x2x1
jax: 0.10.0
libtpu: 0.0.40
codegen_flags: <defaults>
</compile_context>

<pallas_src>
import functools

import jax
import jax.numpy as jnp
from jax.experimental import pallas as pl
from jax.experimental.pallas import tpu as pltpu


# ----------------------------------------------------------------------------
# Pallas kernel: fused 3-layer MLP + mixture-moment head.
# ----------------------------------------------------------------------------
def _stable_softplus(v):
    # softplus(v) = max(v, 0) + log1p(exp(-|v|)); never overflows in f32.
    return jnp.maximum(v, 0.0) + jnp.log1p(jnp.exp(-jnp.abs(v)))


def _mimbo_kernel(x_ref, w1, b1, w2, b2, w3, b3, out_ref, *, n_sub):
    wdt = w1.dtype   # weights arrive pre-cast (f32 or bf16); accumulate in f32

    h = jnp.maximum(
        jnp.dot(x_ref[...].astype(wdt), w1[...],
                preferred_element_type=jnp.float32) + b1[...], 0.0)
    h = jnp.maximum(
        jnp.dot(h.astype(wdt), w2[...],
                preferred_element_type=jnp.float32) + b2[...], 0.0)
    z = jnp.dot(h.astype(wdt), w3[...],
                preferred_element_type=jnp.float32) + b3[...]      # (tb, out_p)

    # Head: split mus / sigmas, mixture moments (mask-based, lane-dense).
    sp = _stable_softplus(z)
    col = jax.lax.broadcasted_iota(jnp.int32, z.shape, 1)
    in_mus = col < n_sub
    in_sig = jnp.logical_and(col >= n_sub, col < 2 * n_sub)
    inv_m = 1.0 / n_sub

    mu = jnp.sum(jnp.where(in_mus, z, 0.0), axis=1, keepdims=True) * inv_m
    second = jnp.sum(jnp.where(in_mus, z * z, 0.0)
                     + jnp.where(in_sig, sp * sp, 0.0),
                     axis=1, keepdims=True) * inv_m
    sigma = jnp.sqrt(jnp.maximum(second - mu * mu, 0.0))   # clamp: no NaN

    # Pack [mus | sigmas | mu | sigma | zeros] into one lane-dense slab.
    packed = jnp.where(in_mus, z,
             jnp.where(in_sig, sp,
             jnp.where(col == 2 * n_sub, mu,
             jnp.where(col == 2 * n_sub + 1, sigma, 0.0))))
    out_ref[...] = packed


# ----------------------------------------------------------------------------
# One-time parameter preparation: sample Bayesian weights + pad to slabs.
# ----------------------------------------------------------------------------
def _rup(v, m):
    return ((v + m - 1) // m) * m


def _pad2(a, rows, cols):
    r, c = a.shape
    return jnp.pad(a, ((0, rows - r), (0, cols - c)))


def prepare_mimbo_params(params, n_subnetworks, *, matmul_dtype=None):
    """Sample w = mu + softplus(rho)*eps ONCE and pad to lane-aligned slabs.

    Reuse the returned dict across forward calls with the same weight sample:
    it removes all per-call sampling/padding glue from the hot path.
    """
    d_in, h1 = params["w1_mu"].shape
    h2 = params["w2_mu"].shape[1]
    d_out = params["w3_mu"].shape[1]
    assert d_out == 2 * n_subnetworks

    lane = 128
    d_in_p = _rup(d_in, 8)              # sublane-only padding for the x stream
    h1_p = _rup(h1, lane)
    h2_p = _rup(h2, lane)
    out_p = _rup(d_out + 2, lane)       # +2 packed columns for (mu, sigma)

    if matmul_dtype is None:
        # bf16 operands only pay off once a contraction dim needs >1 MXU pass.
        matmul_dtype = (jnp.bfloat16 if max(d_in_p, h1_p, h2_p) >= 256
                        else jnp.float32)

    def sample(name):
        return (params[name + "_mu"]
                + jax.nn.softplus(params[name + "_rho"])
                * params[name + "_eps"]).astype(jnp.float32)

    prep = {
        "w1": _pad2(sample("w1"), d_in_p, h1_p).astype(matmul_dtype),
        "b1": _pad2(sample("b1"), 1, h1_p),
        "w2": _pad2(sample("w2"), h1_p, h2_p).astype(matmul_dtype),
        "b2": _pad2(sample("b2"), 1, h2_p),
        "w3": _pad2(sample("w3"), h2_p, out_p).astype(matmul_dtype),
        "b3": _pad2(sample("b3"), 1, out_p),
        "dims": (d_in, d_in_p, h1_p, h2_p, d_out, out_p),
    }
    return prep


def _choose_batch_tile(batch):
    b8 = _rup(batch, 8)
    if b8 >= 2048:
        tb = 1024                       # big tiles: ~85% pipelining efficiency
    elif b8 >= 512:
        tb = _rup((b8 + 1) // 2, 8)     # >=2 grid steps -> both v7x TCs busy
    else:
        tb = b8                         # tiny batch: single grid step
    return tb, _rup(batch, tb)


# ----------------------------------------------------------------------------
# Forward wrappers.
# ----------------------------------------------------------------------------
def mimbo_forward_prepared(x, prep, n_subnetworks):
    x = x.astype(jnp.float32)
    batch, d_in = x.shape
    d_in_ref, d_in_p, h1_p, h2_p, d_out, out_p = prep["dims"]
    assert d_in == d_in_ref

    tb, b_p = _choose_batch_tile(batch)
    x_p = _pad2(x, b_p, d_in_p)

    def full(rows, cols):
        return pl.BlockSpec((rows, cols), lambda i: (0, 0))

    in_specs = [
        pl.BlockSpec((tb, d_in_p), lambda i: (i, 0)),    # streamed per tile
        full(d_in_p, h1_p), full(1, h1_p),               # sampled w1 / b1
        full(h1_p, h2_p), full(1, h2_p),                 # sampled w2 / b2
        full(h2_p, out_p), full(1, out_p),               # sampled w3 / b3
    ]

    packed = pl.pallas_call(
        functools.partial(_mimbo_kernel, n_sub=n_subnetworks),
        out_shape=jax.ShapeDtypeStruct((b_p, out_p), jnp.float32),
        grid=(b_p // tb,),
        in_specs=in_specs,
        out_specs=pl.BlockSpec((tb, out_p), lambda i: (i, 0)),
        compiler_params=pltpu.CompilerParams(
            dimension_semantics=("parallel",)),
    )(x_p, prep["w1"], prep["b1"], prep["w2"], prep["b2"],
      prep["w3"], prep["b3"])

    m = n_subnetworks
    packed = packed[:batch]
    mus = packed[:, :m]
    sigmas = packed[:, m:2 * m]
    mu = packed[:, 2 * m]
    sigma = packed[:, 2 * m + 1]
    return mu, sigma, mus, sigmas


def mimbo_forward(x, params, n_subnetworks):
    prep = prepare_mimbo_params(params, n_subnetworks)
    return mimbo_forward_prepared(x, prep, n_subnetworks)


# ----------------------------------------------------------------------------
# Parameter / epsilon setup (deterministic Bayesian sample) + pure-JAX ref.
# ----------------------------------------------------------------------------
def init_params(key, *, n_subnetworks, hidden_units1, hidden_units2,
                input_dim=1):
    d_in = input_dim * n_subnetworks
    d_out = 2 * n_subnetworks
    dims = [(d_in, hidden_units1), (hidden_units1, hidden_units2),
            (hidden_units2, d_out)]
    params = {}
    keys = iter(jax.random.split(key, 4 * len(dims)))
    for li, (fan_in, fan_out) in enumerate(dims, start=1):
        bound = 1.0 / (fan_in ** 0.5)
        params[f"w{li}_mu"] = jax.random.uniform(
            next(keys), (fan_in, fan_out), jnp.float32, -bound, bound)
        params[f"w{li}_rho"] = jnp.full((fan_in, fan_out), -5.0, jnp.float32)
        params[f"b{li}_mu"] = jax.random.uniform(
            next(keys), (1, fan_out), jnp.float32, -bound, bound)
        params[f"b{li}_rho"] = jnp.full((1, fan_out), -5.0, jnp.float32)
        # One epsilon draw per layer for this forward call (sample=True).
        params[f"w{li}_eps"] = jax.random.normal(
            next(keys), (fan_in, fan_out), jnp.float32)
        params[f"b{li}_eps"] = jax.random.normal(
            next(keys), (1, fan_out), jnp.float32)
    return params


def ref_forward(x, params, n_sub):
    def sample(name):
        return (params[name + "_mu"]
                + jax.nn.softplus(params[name + "_rho"])
                * params[name + "_eps"])

    def layer(h, i):
        return h @ sample(f"w{i}") + sample(f"b{i}")

    h = jax.nn.relu(layer(x, 1))
    h = jax.nn.relu(layer(h, 2))
    z = layer(h, 3)
    mus = z[:, :n_sub]
    sigmas = jax.nn.softplus(z[:, n_sub:])
    mu = jnp.mean(mus, axis=1)
    sigma = jnp.sqrt(jnp.maximum(
        jnp.mean(mus ** 2 + sigmas ** 2, axis=1) - mu ** 2, 0.0))
    return mu, sigma, mus, sigmas


if __name__ == "__main__":
    N_SUB, INPUT_DIM = 2, 1
    H1, H2 = 32, 64
    BATCH = 8

    key = jax.random.PRNGKey(0)
    kx, kp = jax.random.split(key)
    x = jax.random.normal(kx, (BATCH, INPUT_DIM * N_SUB), jnp.float32)
    params = init_params(kp, n_subnetworks=N_SUB, hidden_units1=H1,
                         hidden_units2=H2, input_dim=INPUT_DIM)

    # Prepare (sample + pad) once, then run the fused kernel.
    prep = prepare_mimbo_params(params, N_SUB)
    mu, sigma, mus, sigmas = mimbo_forward_prepared(x, prep, N_SUB)
    jax.block_until_ready((mu, sigma, mus, sigmas))

    assert mu.shape == (BATCH,)
    assert sigma.shape == (BATCH,)
    assert mus.shape == (BATCH, N_SUB)
    assert sigmas.shape == (BATCH, N_SUB)
    assert bool(jnp.all(jnp.isfinite(mu)))
    assert bool(jnp.all(jnp.isfinite(sigma)))
    assert bool(jnp.all(sigma > 0))

    r_mu, r_sigma, r_mus, r_sigmas = ref_forward(x, params, N_SUB)
    assert bool(jnp.allclose(mu, r_mu, rtol=3e-2, atol=3e-2))
    assert bool(jnp.allclose(sigma, r_sigma, rtol=3e-2, atol=3e-2))
    assert bool(jnp.allclose(mus, r_mus, rtol=3e-2, atol=3e-2))
    assert bool(jnp.allclose(sigmas, r_sigmas, rtol=3e-2, atol=3e-2))

    print("KERNEL_OK")
</pallas_src>

<mosaic_0001>
module attributes {stable_mosaic.version = 11 : i64} {
  func.func @_mimbo_kernel(%arg0: i32, %arg1: memref<8x8xf32, #tpu.memory_space<vmem>>, %arg2: memref<8x128xf32, #tpu.memory_space<vmem>>, %arg3: memref<1x128xf32, #tpu.memory_space<vmem>>, %arg4: memref<128x128xf32, #tpu.memory_space<vmem>>, %arg5: memref<1x128xf32, #tpu.memory_space<vmem>>, %arg6: memref<128x128xf32, #tpu.memory_space<vmem>>, %arg7: memref<1x128xf32, #tpu.memory_space<vmem>>, %arg8: memref<8x128xf32, #tpu.memory_space<vmem>>) attributes {dimension_semantics = [#tpu.dimension_semantics<parallel>], iteration_bounds = array<i64: 1>, scalar_prefetch = 0 : i64, scratch_operands = 0 : i64, tpu.core_type = #tpu.core_type<tc>, window_params = [{transform_indices = @transform_0, window_bounds = array<i64: 8, 8>}, {pipeline_mode = #tpu.pipeline_mode<synchronous>, transform_indices = @transform_1, window_bounds = array<i64: 8, 128>}, {pipeline_mode = #tpu.pipeline_mode<synchronous>, transform_indices = @transform_2, window_bounds = array<i64: 1, 128>}, {pipeline_mode = #tpu.pipeline_mode<synchronous>, transform_indices = @transform_3, window_bounds = array<i64: 128, 128>}, {pipeline_mode = #tpu.pipeline_mode<synchronous>, transform_indices = @transform_4, window_bounds = array<i64: 1, 128>}, {pipeline_mode = #tpu.pipeline_mode<synchronous>, transform_indices = @transform_5, window_bounds = array<i64: 128, 128>}, {pipeline_mode = #tpu.pipeline_mode<synchronous>, transform_indices = @transform_6, window_bounds = array<i64: 1, 128>}, {transform_indices = @transform_7, window_bounds = array<i64: 8, 128>}]} {
    %c0 = arith.constant 0 : index
    %c0_0 = arith.constant 0 : index
    %0 = vector.load %arg1[%c0, %c0_0] : memref<8x8xf32, #tpu.memory_space<vmem>>, vector<8x8xf32>
    %c0_1 = arith.constant 0 : index
    %c0_2 = arith.constant 0 : index
    %1 = vector.load %arg2[%c0_1, %c0_2] : memref<8x128xf32, #tpu.memory_space<vmem>>, vector<8x128xf32>
    %cst = arith.constant dense<0.000000e+00> : vector<8x128xf32>
    %2 = tpu.matmul %0, %1, %cst {dimension_numbers = #tpu.dot_dimension_numbers<[1], [0], [0], [1], [0, 0, 1, 1], [], []>} : vector<8x8xf32>, vector<8x128xf32>, vector<8x128xf32> -> vector<8x128xf32>
    %c0_3 = arith.constant 0 : index
    %c0_4 = arith.constant 0 : index
    %3 = vector.load %arg3[%c0_3, %c0_4] : memref<1x128xf32, #tpu.memory_space<vmem>>, vector<1x128xf32>
    %4 = vector.broadcast %3 : vector<1x128xf32> to vector<8x128xf32>
    %5 = arith.addf %2, %4 : vector<8x128xf32>
    %cst_5 = arith.constant 0.000000e+00 : f32
    %6 = vector.broadcast %cst_5 : f32 to vector<8x128xf32>
    %7 = arith.maximumf %5, %6 : vector<8x128xf32>
    %c0_6 = arith.constant 0 : index
    %c0_7 = arith.constant 0 : index
    %8 = vector.load %arg4[%c0_6, %c0_7] : memref<128x128xf32, #tpu.memory_space<vmem>>, vector<128x128xf32>
    %cst_8 = arith.constant dense<0.000000e+00> : vector<8x128xf32>
    %9 = tpu.matmul %7, %8, %cst_8 {dimension_numbers = #tpu.dot_dimension_numbers<[1], [0], [0], [1], [0, 0, 1, 1], [], []>} : vector<8x128xf32>, vector<128x128xf32>, vector<8x128xf32> -> vector<8x128xf32>
    %c0_9 = arith.constant 0 : index
    %c0_10 = arith.constant 0 : index
    %10 = vector.load %arg5[%c0_9, %c0_10] : memref<1x128xf32, #tpu.memory_space<vmem>>, vector<1x128xf32>
    %11 = vector.broadcast %10 : vector<1x128xf32> to vector<8x128xf32>
    %12 = arith.addf %9, %11 : vector<8x128xf32>
    %cst_11 = arith.constant 0.000000e+00 : f32
    %13 = vector.broadcast %cst_11 : f32 to vector<8x128xf32>
    %14 = arith.maximumf %12, %13 : vector<8x128xf32>
    %c0_12 = arith.constant 0 : index
    %c0_13 = arith.constant 0 : index
    %15 = vector.load %arg6[%c0_12, %c0_13] : memref<128x128xf32, #tpu.memory_space<vmem>>, vector<128x128xf32>
    %cst_14 = arith.constant dense<0.000000e+00> : vector<8x128xf32>
    %16 = tpu.matmul %14, %15, %cst_14 {dimension_numbers = #tpu.dot_dimension_numbers<[1], [0], [0], [1], [0, 0, 1, 1], [], []>} : vector<8x128xf32>, vector<128x128xf32>, vector<8x128xf32> -> vector<8x128xf32>
    %c0_15 = arith.constant 0 : index
    %c0_16 = arith.constant 0 : index
    %17 = vector.load %arg7[%c0_15, %c0_16] : memref<1x128xf32, #tpu.memory_space<vmem>>, vector<1x128xf32>
    %18 = vector.broadcast %17 : vector<1x128xf32> to vector<8x128xf32>
    %19 = arith.addf %16, %18 : vector<8x128xf32>
    %cst_17 = arith.constant 0.000000e+00 : f32
    %20 = vector.broadcast %cst_17 : f32 to vector<8x128xf32>
    %21 = arith.maximumf %19, %20 : vector<8x128xf32>
    %22 = math.absf %19 : vector<8x128xf32>
    %cst_18 = arith.constant 0.000000e+00 : f32
    %23 = vector.broadcast %cst_18 : f32 to vector<8x128xf32>
    %24 = arith.subf %23, %22 : vector<8x128xf32>
    %25 = math.exp %24 : vector<8x128xf32>
    %26 = math.log1p %25 : vector<8x128xf32>
    %27 = arith.addf %21, %26 : vector<8x128xf32>
    %28 = tpu.iota {dimensions = array<i32: 1>} : vector<8x128xi32>
    %c2_i32 = arith.constant 2 : i32
    %29 = vector.broadcast %c2_i32 : i32 to vector<8x128xi32>
    %30 = arith.cmpi slt, %28, %29 : vector<8x128xi32>
    %c2_i32_19 = arith.constant 2 : i32
    %31 = vector.broadcast %c2_i32_19 : i32 to vector<8x128xi32>
    %32 = arith.cmpi sge, %28, %31 : vector<8x128xi32>
    %c4_i32 = arith.constant 4 : i32
    %33 = vector.broadcast %c4_i32 : i32 to vector<8x128xi32>
    %34 = arith.cmpi slt, %28, %33 : vector<8x128xi32>
    %35 = arith.andi %32, %34 : vector<8x128xi1>
    %cst_20 = arith.constant 0.000000e+00 : f32
    %36 = vector.broadcast %cst_20 : f32 to vector<8x128xf32>
    %37 = arith.select %30, %19, %36 : vector<8x128xi1>, vector<8x128xf32>
    %cst_21 = arith.constant dense<0.000000e+00> : vector<8xf32>
    %38 = vector.multi_reduction <add>, %37, %cst_21 [1] : vector<8x128xf32> to vector<8xf32>
    %39 = vector.shape_cast %38 : vector<8xf32> to vector<8x1xf32>
    %cst_22 = arith.constant 5.000000e-01 : f32
    %40 = vector.broadcast %cst_22 : f32 to vector<8x1xf32>
    %41 = arith.mulf %39, %40 : vector<8x1xf32>
    %42 = arith.mulf %19, %19 : vector<8x128xf32>
    %cst_23 = arith.constant 0.000000e+00 : f32
    %43 = vector.broadcast %cst_23 : f32 to vector<8x128xf32>
    %44 = arith.select %30, %42, %43 : vector<8x128xi1>, vector<8x128xf32>
    %45 = arith.mulf %27, %27 : vector<8x128xf32>
    %cst_24 = arith.constant 0.000000e+00 : f32
    %46 = vector.broadcast %cst_24 : f32 to vector<8x128xf32>
    %47 = arith.select %35, %45, %46 : vector<8x128xi1>, vector<8x128xf32>
    %48 = arith.addf %44, %47 : vector<8x128xf32>
    %cst_25 = arith.constant dense<0.000000e+00> : vector<8xf32>
    %49 = vector.multi_reduction <add>, %48, %cst_25 [1] : vector<8x128xf32> to vector<8xf32>
    %50 = vector.shape_cast %49 : vector<8xf32> to vector<8x1xf32>
    %cst_26 = arith.constant 5.000000e-01 : f32
    %51 = vector.broadcast %cst_26 : f32 to vector<8x1xf32>
    %52 = arith.mulf %50, %51 : vector<8x1xf32>
    %53 = arith.mulf %41, %41 : vector<8x1xf32>
    %54 = arith.subf %52, %53 : vector<8x1xf32>
    %cst_27 = arith.constant 0.000000e+00 : f32
    %55 = vector.broadcast %cst_27 : f32 to vector<8x1xf32>
    %56 = arith.maximumf %54, %55 : vector<8x1xf32>
    %57 = math.sqrt %56 : vector<8x1xf32>
    %c4_i32_28 = arith.constant 4 : i32
    %58 = vector.broadcast %c4_i32_28 : i32 to vector<8x128xi32>
    %59 = arith.cmpi eq, %28, %58 : vector<8x128xi32>
    %c5_i32 = arith.constant 5 : i32
    %60 = vector.broadcast %c5_i32 : i32 to vector<8x128xi32>
    %61 = arith.cmpi eq, %28, %60 : vector<8x128xi32>
    %cst_29 = arith.constant 0.000000e+00 : f32
    %62 = vector.shape_cast %57 : vector<8x1xf32> to vector<8x1xf32>
    %63 = vector.broadcast %62 : vector<8x1xf32> to vector<8x128xf32>
    %64 = vector.broadcast %cst_29 : f32 to vector<8x128xf32>
    %65 = arith.select %61, %63, %64 : vector<8x128xi1>, vector<8x128xf32>
    %66 = vector.shape_cast %41 : vector<8x1xf32> to vector<8x1xf32>
    %67 = vector.broadcast %66 : vector<8x1xf32> to vector<8x128xf32>
    %68 = arith.select %59, %67, %65 : vector<8x128xi1>, vector<8x128xf32>
    %69 = arith.select %35, %27, %68 : vector<8x128xi1>, vector<8x128xf32>
    %70 = arith.select %30, %19, %69 : vector<8x128xi1>, vector<8x128xf32>
    %c0_30 = arith.constant 0 : index
    %c0_31 = arith.constant 0 : index
    %71 = vector.load %arg8[%c0_30, %c0_31] : memref<8x128xf32, #tpu.memory_space<vmem>>, vector<8x128xf32>
    tpu.vector_store %arg8[%c0_30, %c0_31], %70 {strides = array<i32>} : memref<8x128xf32, #tpu.memory_space<vmem>>, vector<8x128xf32>,
    return
  }
  func.func @transform_0(%arg0: i32) -> (i32, i32) {
    %c0_i32 = arith.constant 0 : i32
    %c0_i32_0 = arith.constant 0 : i32
    return %arg0, %c0_i32 : i32, i32
  }
  func.func @transform_1(%arg0: i32) -> (i32, i32) {
    %c0_i32 = arith.constant 0 : i32
    %c0_i32_0 = arith.constant 0 : i32
    %c0_i32_1 = arith.constant 0 : i32
    return %c0_i32, %c0_i32_0 : i32, i32
  }
  func.func @transform_2(%arg0: i32) -> (i32, i32) {
    %c0_i32 = arith.constant 0 : i32
    %c0_i32_0 = arith.constant 0 : i32
    %c0_i32_1 = arith.constant 0 : i32
    return %c0_i32, %c0_i32_0 : i32, i32
  }
  func.func @transform_3(%arg0: i32) -> (i32, i32) {
    %c0_i32 = arith.constant 0 : i32
    %c0_i32_0 = arith.constant 0 : i32
    %c0_i32_1 = arith.constant 0 : i32
    return %c0_i32, %c0_i32_0 : i32, i32
  }
  func.func @transform_4(%arg0: i32) -> (i32, i32) {
    %c0_i32 = arith.constant 0 : i32
    %c0_i32_0 = arith.constant 0 : i32
    %c0_i32_1 = arith.constant 0 : i32
    return %c0_i32, %c0_i32_0 : i32, i32
  }
  func.func @transform_5(%arg0: i32) -> (i32, i32) {
    %c0_i32 = arith.constant 0 : i32
    %c0_i32_0 = arith.constant 0 : i32
    %c0_i32_1 = arith.constant 0 : i32
    return %c0_i32, %c0_i32_0 : i32, i32
  }
  func.func @transform_6(%arg0: i32) -> (i32, i32) {
    %c0_i32 = arith.constant 0 : i32
    %c0_i32_0 = arith.constant 0 : i32
    %c0_i32_1 = arith.constant 0 : i32
    return %c0_i32, %c0_i32_0 : i32, i32
  }
  func.func @transform_7(%arg0: i32) -> (i32, i32) {
    %c0_i32 = arith.constant 0 : i32
    %c0_i32_0 = arith.constant 0 : i32
    return %arg0, %c0_i32 : i32, i32
  }
}

</mosaic_0001>

<llo_original>
// kernel: tpu_custom_call.1
$region0: #{tpu_custom_call.1}
  #allocation0 [shape = 'u32[]', space=smem, size = 0x4, offset = 0x4, fixed_abs, tag = 'smem constant byte address 0x4 - core index']
  #allocation1 [shape = 'u32[144,128]{1,0:T(1,128)}', space=vmem, size = 0x12000, scoped, tag = 'internal scratch']
  %s0 = inlined_call_operand.hbm [shape: f32[8,8], index: 0, kind: input, shape index: {}]
  %s1 = inlined_call_operand.hbm [shape: f32[8,128], index: 1, kind: input, shape index: {}]
  %s2 = inlined_call_operand.vmem [shape: f32[1,128], index: 2, kind: input, shape index: {}]
  %s3 = inlined_call_operand.hbm [shape: f32[128,128], index: 3, kind: input, shape index: {}]
  %s4 = inlined_call_operand.vmem [shape: f32[1,128], index: 4, kind: input, shape index: {}]
  %s5 = inlined_call_operand.hbm [shape: f32[128,128], index: 5, kind: input, shape index: {}]
  %s6 = inlined_call_operand.vmem [shape: f32[1,128], index: 6, kind: input, shape index: {}]
  %s7 = inlined_call_operand.hbm [shape: f32[8,128], index: 7, kind: output, shape index: {}]
  %s8 = sld [smem:[#allocation0]]
  $region54: #{tpu_custom_call.1} parent=0
    _
  %s10 = ssub.s32 1, %s8
  %s11 = scalar_select 0, %s10, %s8
  $region1: #{tpu_custom_call.1} parent=0
    #allocation2 [shape = 'u8[4096]{0}', space=vmem, size = 0x1000, scoped, tag = 'input window, operand 0, single buffered']
    #allocation3 [shape = 's32[1]{0}', space=sflag, size = 0x4, scoped, tag = 'scoped memory for tpu_custom_call.1']
    #allocation4 [shape = 's32[1]{0}', space=sflag, size = 0x4, scoped, tag = 'scoped memory for tpu_custom_call.1']
    #allocation5 [shape = 'u8[4096]{0}', space=vmem, size = 0x1000, scoped, tag = 'input window, operand 1, single buffered']
    #allocation6 [shape = 's32[1]{0}', space=sflag, size = 0x4, scoped, tag = 'scoped memory for tpu_custom_call.1']
    #allocation7 [shape = 'u8[65536]{0}', space=vmem, size = 0x10000, scoped, tag = 'input window, operand 3, single buffered']
    #allocation8 [shape = 'u8[65536]{0}', space=vmem, size = 0x10000, scoped, tag = 'input window, operand 5, single buffered']
    #allocation9 [shape = 's32[1]{0}', space=sflag, size = 0x4, scoped, tag = 'scoped memory for tpu_custom_call.1']
    #allocation10 [shape = 'u8[4096]{0}', space=vmem, size = 0x1000, scoped, tag = 'output window, operand 0, single buffered']
    %12 = vsyncpa [#allocation3], 0
    %13 = vsyncpa [#allocation6], 0
    %14 = vsyncpa [#allocation9], 0
    %15 = vsyncpa [#allocation4], 0
    // Predicated region
    $region2: #{tpu_custom_call.1} parent=1 // pred_check
      _
    $region3: #{tpu_custom_call.1} parent=1 // pred_check_branch
      %17 = sbr.rel (0) target = $region5
    $region4: #{tpu_custom_call.1} parent=1 // pred_region
      %s19 = ssub.s32 128, 128
      %20 = vsyncadd [#allocation3], %s19
      %s22 = sshll.u32 [#allocation2], 4
      %s23 = int_to_ptr.vmem [resolvable:$true] %s22
      %25 = dma.hbm_to_vmem [thread:$0]  %s0, 128, %s23, [#allocation3]
    $region5: #{tpu_custom_call.1} parent=1 // pred_fallthru
      _
    // Predicated region
    $region6: #{tpu_custom_call.1} parent=1 // pred_check
      _
    $region7: #{tpu_custom_call.1} parent=1 // pred_check_branch
      %27 = sbr.rel (0) target = $region9
    $region8: #{tpu_custom_call.1} parent=1 // pred_region
      %s29 = ssub.s32 128, 128
      %30 = vsyncadd [#allocation6], %s29
      %s32 = sshll.u32 [#allocation5], 4
      %s33 = int_to_ptr.vmem [resolvable:$true] %s32
      %35 = dma.hbm_to_vmem [thread:$0]  %s1, 128, %s33, [#allocation6]
    $region9: #{tpu_custom_call.1} parent=1 // pred_fallthru
      _
    // Predicated region
    $region10: #{tpu_custom_call.1} parent=1 // pred_check
      _
    $region11: #{tpu_custom_call.1} parent=1 // pred_check_branch
      %37 = sbr.rel (0) target = $region13
    $region12: #{tpu_custom_call.1} parent=1 // pred_region
      _
    $region13: #{tpu_custom_call.1} parent=1 // pred_fallthru
      _
    // Predicated region
    $region14: #{tpu_custom_call.1} parent=1 // pred_check
      _
    $region15: #{tpu_custom_call.1} parent=1 // pred_check_branch
      %39 = sbr.rel (0) target = $region17
    $region16: #{tpu_custom_call.1} parent=1 // pred_region
      %s41 = ssub.s32 2048, 2048
      %42 = vsyncadd [#allocation6], %s41
      %s43 = sshll.u32 [#allocation7], 4
      %s44 = int_to_ptr.vmem [resolvable:$true] %s43
      %49 = dma.hbm_to_vmem [thread:$0]  %s3, 2048, %s44, [#allocation6], 128, 128, 8
    $region17: #{tpu_custom_call.1} parent=1 // pred_fallthru
      _
    // Predicated region
    $region18: #{tpu_custom_call.1} parent=1 // pred_check
      _
    $region19: #{tpu_custom_call.1} parent=1 // pred_check_branch
      %51 = sbr.rel (0) target = $region21
    $region20: #{tpu_custom_call.1} parent=1 // pred_region
      _
    $region21: #{tpu_custom_call.1} parent=1 // pred_fallthru
      _
    // Predicated region
    $region22: #{tpu_custom_call.1} parent=1 // pred_check
      _
    $region23: #{tpu_custom_call.1} parent=1 // pred_check_branch
      %53 = sbr.rel (0) target = $region25
    $region24: #{tpu_custom_call.1} parent=1 // pred_region
      %s55 = ssub.s32 2048, 2048
      %56 = vsyncadd [#allocation9], %s55
      %s57 = sshll.u32 [#allocation8], 4
      %s58 = int_to_ptr.vmem [resolvable:$true] %s57
      %63 = dma.hbm_to_vmem [thread:$0]  %s5, 2048, %s58, [#allocation9], 128, 128, 8
    $region25: #{tpu_custom_call.1} parent=1 // pred_fallthru
      _
    // Predicated region
    $region26: #{tpu_custom_call.1} parent=1 // pred_check
      _
    $region27: #{tpu_custom_call.1} parent=1 // pred_check_branch
      %65 = sbr.rel (0) target = $region29
    $region28: #{tpu_custom_call.1} parent=1 // pred_region
      _
    $region29: #{tpu_custom_call.1} parent=1 // pred_fallthru
      _
    // Predicated region
    $region30: #{tpu_custom_call.1} parent=1 // pred_check
      _
    $region31: #{tpu_custom_call.1} parent=1 // pred_check_branch
      %67 = sbr.rel (0) target = $region33
    $region32: #{tpu_custom_call.1} parent=1 // pred_region
      %68 = dma.done [#allocation3], 128
    $region33: #{tpu_custom_call.1} parent=1 // pred_fallthru
      _
    // Predicated region
    $region34: #{tpu_custom_call.1} parent=1 // pred_check
      _
    $region35: #{tpu_custom_call.1} parent=1 // pred_check_branch
      %70 = sbr.rel (0) target = $region37
    $region36: #{tpu_custom_call.1} parent=1 // pred_region
      %71 = dma.done [#allocation6], 128
    $region37: #{tpu_custom_call.1} parent=1 // pred_fallthru
      _
    // Predicated region
    $region38: #{tpu_custom_call.1} parent=1 // pred_check
      _
    $region39: #{tpu_custom_call.1} parent=1 // pred_check_branch
      %73 = sbr.rel (0) target = $region41
    $region40: #{tpu_custom_call.1} parent=1 // pred_region
      %74 = dma.done [#allocation6], 2048
    $region41: #{tpu_custom_call.1} parent=1 // pred_fallthru
      _
    // Predicated region
    $region42: #{tpu_custom_call.1} parent=1 // pred_check
      _
    $region43: #{tpu_custom_call.1} parent=1 // pred_check_branch
      %76 = sbr.rel (0) target = $region45
    $region44: #{tpu_custom_call.1} parent=1 // pred_region
      %77 = dma.done [#allocation9], 2048
    $region45: #{tpu_custom_call.1} parent=1 // pred_fallthru
      _
    %v78 = vld [vmem:[#allocation2] sm:$0xff]
    %v79 = vld [vmem:[#allocation5] sm:$0xff]
    %v80 = vld [vmem:[%s2] sm:$0x1]
    %v82 = vlaneseq
    %v83 = vshrl.u32 %v82, 7
    %v84 = vsub.s32 0, %v83
    %v85 = vrot.slane %v80, %v84
    %vm87 = vcmask 64512
    %v89 = vsel %vm87, %v78, 0
    %91 = vmatprep.subr.mxu0 0.0
    %92 = vmatpush1.msra.mxu0 0.0
    %93 = vmatprep.subr.mxu0 0.0
    %94 = vmatpush1.msra.mxu0 0.0
    %95 = vmatprep.subr.mxu0 0.0
    %96 = vmatpush1.msra.mxu0 0.0
    %97 = vmatprep.subr.mxu0 0.0
    %98 = vmatpush1.msra.mxu0 0.0
    %99 = vmatprep.subr.mxu0 0.0
    %100 = vmatpush1.msra.mxu0 0.0
    %101 = vmatprep.subr.mxu0 0.0
    %102 = vmatpush1.msra.mxu0 0.0
    %103 = vmatprep.subr.mxu0 0.0
    %104 = vmatpush1.msra.mxu0 0.0
    %105 = vmatprep.subr.mxu0 0.0
    %106 = vmatpush1.msra.mxu0 0.0
    %107 = vmatprep.subr.mxu0 0.0
    %108 = vmatpush1.msra.mxu0 0.0
    %109 = vmatprep.subr.mxu0 0.0
    %110 = vmatpush1.msra.mxu0 0.0
    %111 = vmatprep.subr.mxu0 0.0
    %112 = vmatpush1.msra.mxu0 0.0
    %113 = vmatprep.subr.mxu0 0.0
    %114 = vmatpush1.msra.mxu0 0.0
    %115 = vmatprep.subr.mxu0 0.0
    %116 = vmatpush1.msra.mxu0 0.0
    %117 = vmatprep.subr.mxu0 0.0
    %118 = vmatpush1.msra.mxu0 0.0
    %119 = vmatprep.subr.mxu0 0.0
    %120 = vmatpush1.msra.mxu0 0.0
    %121 = vmatprep.subr.mxu0 0.0
    %122 = vmatpush1.msra.mxu0 %v79
    %123 = vmatprep.subr.mxu0 0.0
    %124 = vmatpush2.msra.mxu0 0.0
    %125 = vmatprep.subr.mxu0 0.0
    %126 = vmatpush2.msra.mxu0 0.0
    %127 = vmatprep.subr.mxu0 0.0
    %128 = vmatpush2.msra.mxu0 0.0
    %129 = vmatprep.subr.mxu0 0.0
    %130 = vmatpush2.msra.mxu0 0.0
    %131 = vmatprep.subr.mxu0 0.0
    %132 = vmatpush2.msra.mxu0 0.0
    %133 = vmatprep.subr.mxu0 0.0
    %134 = vmatpush2.msra.mxu0 0.0
    %135 = vmatprep.subr.mxu0 0.0
    %136 = vmatpush2.msra.mxu0 0.0
    %137 = vmatprep.subr.mxu0 0.0
    %138 = vmatpush2.msra.mxu0 0.0
    %139 = vmatprep.subr.mxu0 0.0
    %140 = vmatpush2.msra.mxu0 0.0
    %141 = vmatprep.subr.mxu0 0.0
    %142 = vmatpush2.msra.mxu0 0.0
    %143 = vmatprep.subr.mxu0 0.0
    %144 = vmatpush2.msra.mxu0 0.0
    %145 = vmatprep.subr.mxu0 0.0
    %146 = vmatpush2.msra.mxu0 0.0
    %147 = vmatprep.subr.mxu0 0.0
    %148 = vmatpush2.msra.mxu0 0.0
    %149 = vmatprep.subr.mxu0 0.0
    %150 = vmatpush2.msra.mxu0 0.0
    %151 = vmatprep.subr.mxu0 0.0
    %152 = vmatpush2.msra.mxu0 0.0
    %153 = vmatprep.subr.mxu0 0.0
    %154 = vmatpush2.msra.mxu0 0.0
    %155 = vmatprep.mubr.f32.mxu0 0.0
    %156 = vmatmul.mubr.f32.gmra.mxu0 %v89
    %v157 = vpop.f32.mrf.mxu0
    %v158 = vadd.f32 %v85, %v157
    %v159 = vpop.f32.mrf.mxu0
    %160 = vdwg.mxu0
    %v161 = vmax.f32 %v158, 0.0
    %v162 = vld [vmem:[#allocation7] sm:$0xff]
    %v163 = vld [vmem:[#allocation7 + $0x8] sm:$0xff]
    %v164 = vld [vmem:[#allocation7 + $0x10] sm:$0xff]
    %v165 = vld [vmem:[#allocation7 + $0x18] sm:$0xff]
    %v166 = vld [vmem:[#allocation7 + $0x20] sm:$0xff]
    %v167 = vld [vmem:[#allocation7 + $0x28] sm:$0xff]
    %v168 = vld [vmem:[#allocation7 + $0x30] sm:$0xff]
    %v169 = vld [vmem:[#allocation7 + $0x38] sm:$0xff]
    %v170 = vld [vmem:[#allocation7 + $0x40] sm:$0xff]
    %v171 = vld [vmem:[#allocation7 + $0x48] sm:$0xff]
    %v172 = vld [vmem:[#allocation7 + $0x50] sm:$0xff]
    %v173 = vld [vmem:[#allocation7 + $0x58] sm:$0xff]
    %v174 = vld [vmem:[#allocation7 + $0x60] sm:$0xff]
    %v175 = vld [vmem:[#allocation7 + $0x68] sm:$0xff]
    %v176 = vld [vmem:[#allocation7 + $0x70] sm:$0xff]
    %v177 = vld [vmem:[#allocation7 + $0x78] sm:$0xff]
    %v178 = vld [vmem:[%s4] sm:$0x1]
    %v180 = vlaneseq
    %v181 = vshrl.u32 %v180, 7
    %v182 = vsub.s32 0, %v181
    %v183 = vrot.slane %v178, %v182
    %185 = vmatprep.subr.mxu0 0.0
    %186 = vmatpush1.msra.mxu0 %v177
    %187 = vmatprep.subr.mxu0 0.0
    %188 = vmatpush1.msra.mxu0 %v176
    %189 = vmatprep.subr.mxu0 0.0
    %190 = vmatpush1.msra.mxu0 %v175
    %191 = vmatprep.subr.mxu0 0.0
    %192 = vmatpush1.msra.mxu0 %v174
    %193 = vmatprep.subr.mxu0 0.0
    %194 = vmatpush1.msra.mxu0 %v173
    %195 = vmatprep.subr.mxu0 0.0
    %196 = vmatpush1.msra.mxu0 %v172
    %197 = vmatprep.subr.mxu0 0.0
    %198 = vmatpush1.msra.mxu0 %v171
    %199 = vmatprep.subr.mxu0 0.0
    %200 = vmatpush1.msra.mxu0 %v170
    %201 = vmatprep.subr.mxu0 0.0
    %202 = vmatpush1.msra.mxu0 %v169
    %203 = vmatprep.subr.mxu0 0.0
    %204 = vmatpush1.msra.mxu0 %v168
    %205 = vmatprep.subr.mxu0 0.0
    %206 = vmatpush1.msra.mxu0 %v167
    %207 = vmatprep.subr.mxu0 0.0
    %208 = vmatpush1.msra.mxu0 %v166
    %209 = vmatprep.subr.mxu0 0.0
    %210 = vmatpush1.msra.mxu0 %v165
    %211 = vmatprep.subr.mxu0 0.0
    %212 = vmatpush1.msra.mxu0 %v164
    %213 = vmatprep.subr.mxu0 0.0
    %214 = vmatpush1.msra.mxu0 %v163
    %215 = vmatprep.subr.mxu0 0.0
    %216 = vmatpush1.msra.mxu0 %v162
    %217 = vmatprep.subr.mxu0 0.0
    %218 = vmatpush2.msra.mxu0 0.0
    %219 = vmatprep.subr.mxu0 0.0
    %220 = vmatpush2.msra.mxu0 0.0
    %221 = vmatprep.subr.mxu0 0.0
    %222 = vmatpush2.msra.mxu0 0.0
    %223 = vmatprep.subr.mxu0 0.0
    %224 = vmatpush2.msra.mxu0 0.0
    %225 = vmatprep.subr.mxu0 0.0
    %226 = vmatpush2.msra.mxu0 0.0
    %227 = vmatprep.subr.mxu0 0.0
    %228 = vmatpush2.msra.mxu0 0.0
    %229 = vmatprep.subr.mxu0 0.0
    %230 = vmatpush2.msra.mxu0 0.0
    %231 = vmatprep.subr.mxu0 0.0
    %232 = vmatpush2.msra.mxu0 0.0
    %233 = vmatprep.subr.mxu0 0.0
    %234 = vmatpush2.msra.mxu0 0.0
    %235 = vmatprep.subr.mxu0 0.0
    %236 = vmatpush2.msra.mxu0 0.0
    %237 = vmatprep.subr.mxu0 0.0
    %238 = vmatpush2.msra.mxu0 0.0
    %239 = vmatprep.subr.mxu0 0.0
    %240 = vmatpush2.msra.mxu0 0.0
    %241 = vmatprep.subr.mxu0 0.0
    %242 = vmatpush2.msra.mxu0 0.0
    %243 = vmatprep.subr.mxu0 0.0
    %244 = vmatpush2.msra.mxu0 0.0
    %245 = vmatprep.subr.mxu0 0.0
    %246 = vmatpush2.msra.mxu0 0.0
    %247 = vmatprep.subr.mxu0 0.0
    %248 = vmatpush2.msra.mxu0 0.0
    %249 = vmatprep.mubr.f32.mxu0 0.0
    %250 = vmatmul.mubr.f32.gmra.mxu0 %v161
    %v251 = vpop.f32.mrf.mxu0
    %v252 = vadd.f32 %v183, %v251
    %v253 = vpop.f32.mrf.mxu0
    %254 = vdwg.mxu0
    %v255 = vmax.f32 %v252, 0.0
    %v256 = vld [vmem:[#allocation8] sm:$0xff]
    %v257 = vld [vmem:[#allocation8 + $0x8] sm:$0xff]
    %v258 = vld [vmem:[#allocation8 + $0x10] sm:$0xff]
    %v259 = vld [vmem:[#allocation8 + $0x18] sm:$0xff]
    %v260 = vld [vmem:[#allocation8 + $0x20] sm:$0xff]
    %v261 = vld [vmem:[#allocation8 + $0x28] sm:$0xff]
    %v262 = vld [vmem:[#allocation8 + $0x30] sm:$0xff]
    %v263 = vld [vmem:[#allocation8 + $0x38] sm:$0xff]
    %v264 = vld [vmem:[#allocation8 + $0x40] sm:$0xff]
    %v265 = vld [vmem:[#allocation8 + $0x48] sm:$0xff]
    %v266 = vld [vmem:[#allocation8 + $0x50] sm:$0xff]
    %v267 = vld [vmem:[#allocation8 + $0x58] sm:$0xff]
    %v268 = vld [vmem:[#allocation8 + $0x60] sm:$0xff]
    %v269 = vld [vmem:[#allocation8 + $0x68] sm:$0xff]
    %v270 = vld [vmem:[#allocation8 + $0x70] sm:$0xff]
    %v271 = vld [vmem:[#allocation8 + $0x78] sm:$0xff]
    %v272 = vld [vmem:[%s6] sm:$0x1]
    %v274 = vlaneseq
    %v275 = vshrl.u32 %v274, 7
    %v276 = vsub.s32 0, %v275
    %v277 = vrot.slane %v272, %v276
    %279 = vmatprep.subr.mxu0 0.0
    %280 = vmatpush1.msra.mxu0 %v271
    %281 = vmatprep.subr.mxu0 0.0
    %282 = vmatpush1.msra.mxu0 %v270
    %283 = vmatprep.subr.mxu0 0.0
    %284 = vmatpush1.msra.mxu0 %v269
    %285 = vmatprep.subr.mxu0 0.0
    %286 = vmatpush1.msra.mxu0 %v268
    %287 = vmatprep.subr.mxu0 0.0
    %288 = vmatpush1.msra.mxu0 %v267
    %289 = vmatprep.subr.mxu0 0.0
    %290 = vmatpush1.msra.mxu0 %v266
    %291 = vmatprep.subr.mxu0 0.0
    %292 = vmatpush1.msra.mxu0 %v265
    %293 = vmatprep.subr.mxu0 0.0
    %294 = vmatpush1.msra.mxu0 %v264
    %295 = vmatprep.subr.mxu0 0.0
    %296 = vmatpush1.msra.mxu0 %v263
    %297 = vmatprep.subr.mxu0 0.0
    %298 = vmatpush1.msra.mxu0 %v262
    %299 = vmatprep.subr.mxu0 0.0
    %300 = vmatpush1.msra.mxu0 %v261
    %301 = vmatprep.subr.mxu0 0.0
    %302 = vmatpush1.msra.mxu0 %v260
    %303 = vmatprep.subr.mxu0 0.0
    %304 = vmatpush1.msra.mxu0 %v259
    %305 = vmatprep.subr.mxu0 0.0
    %306 = vmatpush1.msra.mxu0 %v258
    %307 = vmatprep.subr.mxu0 0.0
    %308 = vmatpush1.msra.mxu0 %v257
    %309 = vmatprep.subr.mxu0 0.0
    %310 = vmatpush1.msra.mxu0 %v256
    %311 = vmatprep.subr.mxu0 0.0
    %312 = vmatpush2.msra.mxu0 0.0
    %313 = vmatprep.subr.mxu0 0.0
    %314 = vmatpush2.msra.mxu0 0.0
    %315 = vmatprep.subr.mxu0 0.0
    %316 = vmatpush2.msra.mxu0 0.0
    %317 = vmatprep.subr.mxu0 0.0
    %318 = vmatpush2.msra.mxu0 0.0
    %319 = vmatprep.subr.mxu0 0.0
    %320 = vmatpush2.msra.mxu0 0.0
    %321 = vmatprep.subr.mxu0 0.0
    %322 = vmatpush2.msra.mxu0 0.0
    %323 = vmatprep.subr.mxu0 0.0
    %324 = vmatpush2.msra.mxu0 0.0
    %325 = vmatprep.subr.mxu0 0.0
    %326 = vmatpush2.msra.mxu0 0.0
    %327 = vmatprep.subr.mxu0 0.0
    %328 = vmatpush2.msra.mxu0 0.0
    %329 = vmatprep.subr.mxu0 0.0
    %330 = vmatpush2.msra.mxu0 0.0
    %331 = vmatprep.subr.mxu0 0.0
    %332 = vmatpush2.msra.mxu0 0.0
    %333 = vmatprep.subr.mxu0 0.0
    %334 = vmatpush2.msra.mxu0 0.0
    %335 = vmatprep.subr.mxu0 0.0
    %336 = vmatpush2.msra.mxu0 0.0
    %337 = vmatprep.subr.mxu0 0.0
    %338 = vmatpush2.msra.mxu0 0.0
    %339 = vmatprep.subr.mxu0 0.0
    %340 = vmatpush2.msra.mxu0 0.0
    %341 = vmatprep.subr.mxu0 0.0
    %342 = vmatpush2.msra.mxu0 0.0
    %343 = vmatprep.mubr.f32.mxu0 0.0
    %344 = vmatmul.mubr.f32.gmra.mxu0 %v255
    %v345 = vpop.f32.mrf.mxu0
    %v346 = vadd.f32 %v277, %v345
    %v347 = vpop.f32.mrf.mxu0
    %348 = vdwg.mxu0
    %v349 = vmax.f32 %v346, 0.0
    %v350 = vand.u32 2147483647, %v346
    %v351 = vsub.f32 0.0, %v350
    %v352 = vmul.f32 %v351, 1.442695
    %v353 = vpow.pop %v352
    %v354 = vadd.f32 %v353, 1.0
    %v355 = vlog2.pop %v354
    %v356 = vmul.f32 %v355, 0.6931472
    %v357 = vmul.f32 -0.5, %v353
    %v358 = vadd.f32 %v357, 1.0
    %v359 = vmul.f32 %v358, %v353
    %v360 = vand.u32 2147483647, %v353
    %vm361 = vcmp.lt.f32.partialorder %v360, 0.0004427343
    %v362 = vsel %vm361, %v359, %v356
    %v363 = vadd.f32 %v349, %v362
    %v364 = vlaneseq
    %v365 = vand.u32 %v364, 127
    %vm366 = vcmp.lt.s32.totalorder %v365, 2
    %vm367 = vcmp.ge.s32.totalorder %v365, 2
    %vm368 = vcmp.lt.s32.totalorder %v365, 4
    %vm369 = vmand %vm367, %vm368
    %v370 = vsel %vm366, %v346, 0.0
    %371 = vadd.xlane.f32.xlu0 %v370
    %v372 = vpop.xlane.xlu0 %371
    %v373 = vmul.f32 %v372, 0.5
    %v374 = vmul.f32 %v346, %v346
    %v375 = vsel %vm366, %v374, 0.0
    %v376 = vmul.f32 %v363, %v363
    %v377 = vsel %vm369, %v376, 0.0
    %v378 = vadd.f32 %v375, %v377
    %379 = vadd.xlane.f32.xlu0 %v378
    %v380 = vpop.xlane.xlu0 %379
    %v381 = vmul.f32 %v380, 0.5
    %v382 = vmul.f32 %v373, %v373
    %v383 = vsub.f32 %v381, %v382
    %v384 = vmax.f32 %v383, 0.0
    %v385 = vrsqrt.pop %v384
    %v386 = vmul.f32 %v384, %v385
    %vm387 = vcmp.eq.f32.partialorder %v384, inf
    %v388 = vsel %vm387, %v384, %v386
    %vm389 = vcmp.eq.f32.partialorder %v384, 0.0
    %v390 = vand.u32 %v384, 2147483648
    %v391 = vsel %vm389, %v390, %v388
    %vm392 = vcmp.eq.s32.totalorder %v365, 4
    %vm393 = vcmp.eq.s32.totalorder %v365, 5
    %v394 = vsel %vm393, %v391, 0.0
    %v395 = vsel %vm392, %v373, %v394
    %v396 = vsel %vm369, %v363, %v395
    %v397 = vsel %vm366, %v346, %v396
    %398 = vst [vmem:[#allocation10] sm:$0xff] %v397
    // Predicated region
    $region46: #{tpu_custom_call.1} parent=1 // pred_check
      _
    $region47: #{tpu_custom_call.1} parent=1 // pred_check_branch
      %400 = sbr.rel (0) target = $region49
    $region48: #{tpu_custom_call.1} parent=1 // pred_region
      %s402 = ssub.s32 128, 128
      %403 = vsyncadd [#allocation4], %s402
      %s405 = sshll.u32 [#allocation10], 4
      %s406 = int_to_ptr.vmem [resolvable:$true] %s405
      %408 = dma.vmem_to_hbm [thread:$0]  %s406, 128, %s7, [#allocation4]
    $region49: #{tpu_custom_call.1} parent=1 // pred_fallthru
      _
    // Predicated region
    $region50: #{tpu_custom_call.1} parent=1 // pred_check
      _
    $region51: #{tpu_custom_call.1} parent=1 // pred_check_branch
      %410 = sbr.rel (0) target = $region53
    $region52: #{tpu_custom_call.1} parent=1 // pred_region
      %411 = dma.done [#allocation4], 128
    $region53: #{tpu_custom_call.1} parent=1 // pred_fallthru
      _
    %412 = vsyncpa [#allocation3], 1
    %413 = vsyncpa [#allocation6], 1
    %414 = vsyncpa [#allocation9], 1
    %415 = vsyncpa [#allocation4], 1

</llo_original>
